<compile_context>
chip_gen: v7x
topology: tpu7x:2x2x1
jax: 0.10.0
libtpu: 0.0.40
codegen_flags: <defaults>
</compile_context>

<pallas_src>
import jax
import jax.numpy as jnp
from jax.experimental import pallas as pl
from jax.experimental.pallas import tpu as pltpu


def high_mc_kernel(am_ref, lm_ref, mask_ref,
                   w1t_ref, w2t_ref, b12_ref, w3_ref, b3_ref,
                   out_ref):
    O, Bt, E = am_ref.shape

    # h2 = last_memory @ W2.T + (b1 + b2) -- bf16 MXU operands, f32 accumulate.
    h2 = jnp.dot(lm_ref[...].astype(jnp.bfloat16), w2t_ref[...],
                 preferred_element_type=jnp.float32) + b12_ref[...]      # (Bt, E)

    am = am_ref[...]                                                     # (O, Bt, E) f32
    # One long-M MXU matmul over the merged (O*Bt, E) leading dims. The merge is
    # layout-free because Bt is a multiple of the sublane tile (8).
    h1 = jnp.dot(am.reshape(O * Bt, E).astype(jnp.bfloat16), w1t_ref[...],
                 preferred_element_type=jnp.float32).reshape(O, Bt, E)

    w3 = w3_ref[...]                   # (1, E) f32
    b3 = b3_ref[0]                     # scalar (SMEM)
    mask = mask_ref[...]               # (Bt, O) f32, nonzero == masked

    acc = jnp.zeros((Bt, E), dtype=jnp.float32)
    # The Markov order O is tiny (1..3) and static -> unroll; epilogue stays f32.
    for o in range(O):
        t_o = jnp.tanh(h1[o] + h2)                                       # (Bt, E)
        s_o = jnp.sum(t_o * w3, axis=-1, keepdims=True) + b3             # (Bt, 1)
        s_o = jnp.where(mask[:, o:o + 1] != 0.0,
                        jnp.float32(-1000000000.0), s_o)                 # masked_fill_
        acc = acc + s_o * am[o]                                          # exact f32 values
    out_ref[...] = acc


def _round_up(x, m):
    return ((x + m - 1) // m) * m


def _vmem_plan(Bp, O, E):
    """Pick the batch tile Bt and vmem_limit with (sublane, lane)-padding aware
    accounting, budgeted per TPU generation."""
    try:
        phys = int(getattr(pltpu.get_tpu_info(), "vmem_capacity_bytes", 0))
    except Exception:
        phys = 0
    if phys >= (100 << 20):            # v5e / v6e: 128 MiB VMEM per TensorCore
        cap = 96 << 20
    else:                              # v7x (64 MiB per TC) or unknown: conservative
        cap = 44 << 20
    budget = int(cap * 0.65)

    f32, bf16 = 4, 2
    Ep = _round_up(E, 128)             # lane padding of E
    # Streamed blocks (x2 for double buffering), per row of Bt:
    stream_per_row = 2 * (O * Ep * f32       # all_memory  (O, Bt, E) f32
                          + Ep * f32         # last_memory (Bt, E)    f32
                          + 128 * f32)       # mask        (Bt, O->128 lanes) f32
    # In-kernel temporaries per row (h1 f32, bf16 MXU copy, h2/acc/t/slack):
    live_per_row = (10 * O + 24) * Ep
    # Resident weights / biases (bf16 ExE x2, a few (1,E) rows) + fixed margin.
    resident = 2 * _round_up(E, 16) * Ep * bf16 + 4 * 8 * Ep * f32 + (1 << 20)

    bt = (budget - resident) // max(stream_per_row + live_per_row, 1)
    bt = max(8, (bt // 8) * 8)
    bt = min(bt, Bp)                   # Bp is already a multiple of 8
    # Keep >= 2 grid steps when the batch allows it so the "parallel" axis can
    # shard across v7x's 2 TensorCores (harmless elsewhere: ~0.35us/step).
    if Bp >= 16:
        bt = min(bt, _round_up(pl.cdiv(Bp, 2), 8))

    est = resident + bt * (stream_per_row + live_per_row)
    vmem_limit = int(min(max(int(est * 1.25) + (2 << 20), 32 << 20), cap))
    return bt, vmem_limit


def high_mc_forward(all_memory, last_memory, mask, W1, b1, W2, b2, W3, b3):
    """all_memory: (B, O, E) f32, last_memory: (B, E) f32, mask: (B, O) bool."""
    B, O, E = all_memory.shape
    Bp = _round_up(B, 8)
    Bt, vmem_limit = _vmem_plan(Bp, O, E)

    # Layout plumbing (wrapper side): (O, B, E) puts the aligned (B, E) dims on
    # (sublane, lane); stream f32, no bf16 cast pass over the big tensors.
    am_t = jnp.transpose(all_memory.astype(jnp.float32), (1, 0, 2))      # (O, B, E)
    lm = last_memory.astype(jnp.float32)
    mk = mask.astype(jnp.float32)
    if Bp != B:
        am_t = jnp.pad(am_t, ((0, 0), (0, Bp - B), (0, 0)))
        lm = jnp.pad(lm, ((0, Bp - B), (0, 0)))
        mk = jnp.pad(mk, ((0, Bp - B), (0, 0)))

    w1t = jnp.transpose(W1).astype(jnp.bfloat16)      # one-time transpose: x @ W1.T
    w2t = jnp.transpose(W2).astype(jnp.bfloat16)
    b12 = (b1 + b2).reshape(1, E).astype(jnp.float32)
    w3r = W3.reshape(1, E).astype(jnp.float32)        # nn.Linear(E, 1).weight is (1, E)
    b3s = b3.reshape(1).astype(jnp.float32)

    grid = (pl.cdiv(Bp, Bt),)
    grid_spec = pltpu.PrefetchScalarGridSpec(
        num_scalar_prefetch=0,
        grid=grid,
        in_specs=[
            pl.BlockSpec((O, Bt, E), lambda i: (0, i, 0)),      # all_memory (f32)
            pl.BlockSpec((Bt, E), lambda i: (i, 0)),            # last_memory (f32)
            pl.BlockSpec((Bt, O), lambda i: (i, 0)),            # mask (f32)
            pl.BlockSpec((E, E), lambda i: (0, 0)),             # W1.T resident (bf16)
            pl.BlockSpec((E, E), lambda i: (0, 0)),             # W2.T resident (bf16)
            pl.BlockSpec((1, E), lambda i: (0, 0)),             # b1 + b2 (f32)
            pl.BlockSpec((1, E), lambda i: (0, 0)),             # W3 row (f32)
            pl.BlockSpec(memory_space=pltpu.MemorySpace.SMEM),  # b3 scalar
        ],
        out_specs=pl.BlockSpec((Bt, E), lambda i: (i, 0)),
    )

    out = pl.pallas_call(
        high_mc_kernel,
        out_shape=jax.ShapeDtypeStruct((Bp, E), jnp.float32),
        grid_spec=grid_spec,
        compiler_params=pltpu.CompilerParams(
            dimension_semantics=("parallel",),
            vmem_limit_bytes=vmem_limit,
        ),
    )(am_t, lm, mk, w1t, w2t, b12, w3r, b3s)

    return out[:B] if Bp != B else out


def high_mc_reference(all_memory, last_memory, mask, W1, b1, W2, b2, W3, b3,
                      bf16_mm=False):
    """Pure-JAX mirror of High_MC.forward (optionally with bf16 MXU operands)."""
    cast = (lambda x: x.astype(jnp.bfloat16)) if bf16_mm else (lambda x: x)
    h1 = jnp.einsum('boe,fe->bof', cast(all_memory), cast(W1),
                    preferred_element_type=jnp.float32)
    h2 = jnp.einsum('be,fe->bf', cast(last_memory), cast(W2),
                    preferred_element_type=jnp.float32)
    t = jnp.tanh(h1 + (h2 + b1 + b2)[:, None, :])
    s = jnp.einsum('boe,e->bo', t, W3.reshape(-1)) + b3.reshape(())
    s = jnp.where(mask, jnp.float32(-1000000000.0), s)
    return jnp.sum(s[..., None] * all_memory.astype(jnp.float32), axis=1)


if __name__ == "__main__":
    B, ORDER, E = 2, 3, 32

    key = jax.random.PRNGKey(0)
    k_am, k_lm, k_mask, k_w1, k_b1, k_w2, k_b2, k_w3, k_b3 = jax.random.split(key, 9)

    all_memory = jax.random.normal(k_am, (B, ORDER, E), dtype=jnp.float32)
    last_memory = jax.random.normal(k_lm, (B, E), dtype=jnp.float32)
    mask = jax.random.bernoulli(k_mask, 0.3, (B, ORDER))

    scale = 1.0 / jnp.sqrt(E)
    W1 = jax.random.uniform(k_w1, (E, E), minval=-scale, maxval=scale, dtype=jnp.float32)
    b1 = jax.random.uniform(k_b1, (E,), minval=-scale, maxval=scale, dtype=jnp.float32)
    W2 = jax.random.uniform(k_w2, (E, E), minval=-scale, maxval=scale, dtype=jnp.float32)
    b2 = jax.random.uniform(k_b2, (E,), minval=-scale, maxval=scale, dtype=jnp.float32)
    W3 = jax.random.uniform(k_w3, (1, E), minval=-scale, maxval=scale, dtype=jnp.float32)
    b3 = jax.random.uniform(k_b3, (1,), minval=-scale, maxval=scale, dtype=jnp.float32)

    out = high_mc_forward(all_memory, last_memory, mask, W1, b1, W2, b2, W3, b3)
    out = jax.block_until_ready(out)

    # The kernel streams f32 and casts only the MXU operands to bf16, so compare
    # against a reference that does the same (the weighted sum itself is exact f32).
    ref = high_mc_reference(all_memory, last_memory, mask,
                            W1, b1, W2, b2, W3, b3, bf16_mm=True)

    assert out.shape == (B, E)
    assert not jnp.any(jnp.isnan(out)), "NaN in kernel output"
    assert jnp.allclose(out, ref, rtol=2e-2, atol=2e-2), "mismatch vs reference"

    print("KERNEL_OK")
</pallas_src>

<mosaic_0001>
module attributes {stable_mosaic.version = 11 : i64} {
  func.func @high_mc_kernel(%arg0: i32, %arg1: memref<3x8x32xf32, #tpu.memory_space<vmem>>, %arg2: memref<8x32xf32, #tpu.memory_space<vmem>>, %arg3: memref<8x3xf32, #tpu.memory_space<vmem>>, %arg4: memref<32x32xbf16, #tpu.memory_space<vmem>>, %arg5: memref<32x32xbf16, #tpu.memory_space<vmem>>, %arg6: memref<1x32xf32, #tpu.memory_space<vmem>>, %arg7: memref<1x32xf32, #tpu.memory_space<vmem>>, %arg8: memref<1xf32, #tpu.memory_space<smem>>, %arg9: memref<8x32xf32, #tpu.memory_space<vmem>>) attributes {dimension_semantics = [#tpu.dimension_semantics<parallel>], iteration_bounds = array<i64: 1>, scalar_prefetch = 0 : i64, scratch_operands = 0 : i64, tpu.core_type = #tpu.core_type<tc>, window_params = [{transform_indices = @transform_0, window_bounds = array<i64: 3, 8, 32>}, {transform_indices = @transform_1, window_bounds = array<i64: 8, 32>}, {transform_indices = @transform_2, window_bounds = array<i64: 8, 3>}, {pipeline_mode = #tpu.pipeline_mode<synchronous>, transform_indices = @transform_3, window_bounds = array<i64: 32, 32>}, {pipeline_mode = #tpu.pipeline_mode<synchronous>, transform_indices = @transform_4, window_bounds = array<i64: 32, 32>}, {pipeline_mode = #tpu.pipeline_mode<synchronous>, transform_indices = @transform_5, window_bounds = array<i64: 1, 32>}, {pipeline_mode = #tpu.pipeline_mode<synchronous>, transform_indices = @transform_6, window_bounds = array<i64: 1, 32>}, {transform_indices = @transform_7, window_bounds = array<i64: 1>}, {transform_indices = @transform_8, window_bounds = array<i64: 8, 32>}]} {
    %c0 = arith.constant 0 : index
    %c0_0 = arith.constant 0 : index
    %0 = vector.load %arg2[%c0, %c0_0] : memref<8x32xf32, #tpu.memory_space<vmem>>, vector<8x32xf32>
    %1 = arith.truncf %0 : vector<8x32xf32> to vector<8x32xbf16>
    %c0_1 = arith.constant 0 : index
    %c0_2 = arith.constant 0 : index
    %2 = vector.load %arg5[%c0_1, %c0_2] : memref<32x32xbf16, #tpu.memory_space<vmem>>, vector<32x32xbf16>
    %cst = arith.constant dense<0.000000e+00> : vector<8x32xf32>
    %3 = tpu.matmul %1, %2, %cst {dimension_numbers = #tpu.dot_dimension_numbers<[1], [0], [0], [1], [0, 0, 1, 1], [], []>} : vector<8x32xbf16>, vector<32x32xbf16>, vector<8x32xf32> -> vector<8x32xf32>
    %c0_3 = arith.constant 0 : index
    %c0_4 = arith.constant 0 : index
    %4 = vector.load %arg6[%c0_3, %c0_4] : memref<1x32xf32, #tpu.memory_space<vmem>>, vector<1x32xf32>
    %5 = vector.broadcast %4 : vector<1x32xf32> to vector<8x32xf32>
    %6 = arith.addf %3, %5 : vector<8x32xf32>
    %c0_5 = arith.constant 0 : index
    %c0_6 = arith.constant 0 : index
    %c0_7 = arith.constant 0 : index
    %7 = vector.load %arg1[%c0_5, %c0_6, %c0_7] : memref<3x8x32xf32, #tpu.memory_space<vmem>>, vector<3x8x32xf32>
    %8 = vector.shape_cast %7 : vector<3x8x32xf32> to vector<24x32xf32>
    %9 = arith.truncf %8 : vector<24x32xf32> to vector<24x32xbf16>
    %c0_8 = arith.constant 0 : index
    %c0_9 = arith.constant 0 : index
    %10 = vector.load %arg4[%c0_8, %c0_9] : memref<32x32xbf16, #tpu.memory_space<vmem>>, vector<32x32xbf16>
    %cst_10 = arith.constant dense<0.000000e+00> : vector<24x32xf32>
    %11 = tpu.matmul %9, %10, %cst_10 {dimension_numbers = #tpu.dot_dimension_numbers<[1], [0], [0], [1], [0, 0, 1, 1], [], []>} : vector<24x32xbf16>, vector<32x32xbf16>, vector<24x32xf32> -> vector<24x32xf32>
    %12 = vector.shape_cast %11 : vector<24x32xf32> to vector<3x8x32xf32>
    %c0_11 = arith.constant 0 : index
    %c0_12 = arith.constant 0 : index
    %13 = vector.load %arg7[%c0_11, %c0_12] : memref<1x32xf32, #tpu.memory_space<vmem>>, vector<1x32xf32>
    %c0_13 = arith.constant 0 : index
    %14 = memref.load %arg8[%c0_13] : memref<1xf32, #tpu.memory_space<smem>>
    %c0_14 = arith.constant 0 : index
    %c0_15 = arith.constant 0 : index
    %15 = vector.load %arg3[%c0_14, %c0_15] : memref<8x3xf32, #tpu.memory_space<vmem>>, vector<8x3xf32>
    %cst_16 = arith.constant 0.000000e+00 : f32
    %16 = vector.broadcast %cst_16 : f32 to vector<8x32xf32>
    %17 = vector.extract_strided_slice %12 {offsets = [0, 0, 0], sizes = [1, 8, 32], strides = [1, 1, 1]} : vector<3x8x32xf32> to vector<1x8x32xf32>
    %18 = vector.shape_cast %17 : vector<1x8x32xf32> to vector<8x32xf32>
    %19 = arith.addf %18, %6 : vector<8x32xf32>
    %20 = math.tanh %19 : vector<8x32xf32>
    %21 = vector.broadcast %13 : vector<1x32xf32> to vector<8x32xf32>
    %22 = arith.mulf %20, %21 : vector<8x32xf32>
    %cst_17 = arith.constant dense<0.000000e+00> : vector<8xf32>
    %23 = vector.multi_reduction <add>, %22, %cst_17 [1] : vector<8x32xf32> to vector<8xf32>
    %24 = vector.shape_cast %23 : vector<8xf32> to vector<8x1xf32>
    %25 = vector.broadcast %14 : f32 to vector<8x1xf32>
    %26 = arith.addf %24, %25 : vector<8x1xf32>
    %27 = vector.extract_strided_slice %15 {offsets = [0, 0], sizes = [8, 1], strides = [1, 1]} : vector<8x3xf32> to vector<8x1xf32>
    %cst_18 = arith.constant 0.000000e+00 : f32
    %28 = vector.broadcast %cst_18 : f32 to vector<8x1xf32>
    %29 = arith.cmpf one, %27, %28 : vector<8x1xf32>
    %cst_19 = arith.constant -1.000000e+09 : f32
    %30 = vector.broadcast %cst_19 : f32 to vector<8x1xf32>
    %31 = arith.select %29, %30, %26 : vector<8x1xi1>, vector<8x1xf32>
    %32 = vector.extract_strided_slice %7 {offsets = [0, 0, 0], sizes = [1, 8, 32], strides = [1, 1, 1]} : vector<3x8x32xf32> to vector<1x8x32xf32>
    %33 = vector.shape_cast %32 : vector<1x8x32xf32> to vector<8x32xf32>
    %34 = vector.broadcast %31 : vector<8x1xf32> to vector<8x32xf32>
    %35 = arith.mulf %34, %33 : vector<8x32xf32>
    %36 = arith.addf %16, %35 : vector<8x32xf32>
    %37 = vector.extract_strided_slice %12 {offsets = [1, 0, 0], sizes = [1, 8, 32], strides = [1, 1, 1]} : vector<3x8x32xf32> to vector<1x8x32xf32>
    %38 = vector.shape_cast %37 : vector<1x8x32xf32> to vector<8x32xf32>
    %39 = arith.addf %38, %6 : vector<8x32xf32>
    %40 = math.tanh %39 : vector<8x32xf32>
    %41 = vector.broadcast %13 : vector<1x32xf32> to vector<8x32xf32>
    %42 = arith.mulf %40, %41 : vector<8x32xf32>
    %cst_20 = arith.constant dense<0.000000e+00> : vector<8xf32>
    %43 = vector.multi_reduction <add>, %42, %cst_20 [1] : vector<8x32xf32> to vector<8xf32>
    %44 = vector.shape_cast %43 : vector<8xf32> to vector<8x1xf32>
    %45 = vector.broadcast %14 : f32 to vector<8x1xf32>
    %46 = arith.addf %44, %45 : vector<8x1xf32>
    %47 = vector.extract_strided_slice %15 {offsets = [0, 1], sizes = [8, 1], strides = [1, 1]} : vector<8x3xf32> to vector<8x1xf32>
    %cst_21 = arith.constant 0.000000e+00 : f32
    %48 = vector.broadcast %cst_21 : f32 to vector<8x1xf32>
    %49 = arith.cmpf one, %47, %48 : vector<8x1xf32>
    %cst_22 = arith.constant -1.000000e+09 : f32
    %50 = vector.broadcast %cst_22 : f32 to vector<8x1xf32>
    %51 = arith.select %49, %50, %46 : vector<8x1xi1>, vector<8x1xf32>
    %52 = vector.extract_strided_slice %7 {offsets = [1, 0, 0], sizes = [1, 8, 32], strides = [1, 1, 1]} : vector<3x8x32xf32> to vector<1x8x32xf32>
    %53 = vector.shape_cast %52 : vector<1x8x32xf32> to vector<8x32xf32>
    %54 = vector.broadcast %51 : vector<8x1xf32> to vector<8x32xf32>
    %55 = arith.mulf %54, %53 : vector<8x32xf32>
    %56 = arith.addf %36, %55 : vector<8x32xf32>
    %57 = vector.extract_strided_slice %12 {offsets = [2, 0, 0], sizes = [1, 8, 32], strides = [1, 1, 1]} : vector<3x8x32xf32> to vector<1x8x32xf32>
    %58 = vector.shape_cast %57 : vector<1x8x32xf32> to vector<8x32xf32>
    %59 = arith.addf %58, %6 : vector<8x32xf32>
    %60 = math.tanh %59 : vector<8x32xf32>
    %61 = vector.broadcast %13 : vector<1x32xf32> to vector<8x32xf32>
    %62 = arith.mulf %60, %61 : vector<8x32xf32>
    %cst_23 = arith.constant dense<0.000000e+00> : vector<8xf32>
    %63 = vector.multi_reduction <add>, %62, %cst_23 [1] : vector<8x32xf32> to vector<8xf32>
    %64 = vector.shape_cast %63 : vector<8xf32> to vector<8x1xf32>
    %65 = vector.broadcast %14 : f32 to vector<8x1xf32>
    %66 = arith.addf %64, %65 : vector<8x1xf32>
    %67 = vector.extract_strided_slice %15 {offsets = [0, 2], sizes = [8, 1], strides = [1, 1]} : vector<8x3xf32> to vector<8x1xf32>
    %cst_24 = arith.constant 0.000000e+00 : f32
    %68 = vector.broadcast %cst_24 : f32 to vector<8x1xf32>
    %69 = arith.cmpf one, %67, %68 : vector<8x1xf32>
    %cst_25 = arith.constant -1.000000e+09 : f32
    %70 = vector.broadcast %cst_25 : f32 to vector<8x1xf32>
    %71 = arith.select %69, %70, %66 : vector<8x1xi1>, vector<8x1xf32>
    %72 = vector.extract_strided_slice %7 {offsets = [2, 0, 0], sizes = [1, 8, 32], strides = [1, 1, 1]} : vector<3x8x32xf32> to vector<1x8x32xf32>
    %73 = vector.shape_cast %72 : vector<1x8x32xf32> to vector<8x32xf32>
    %74 = vector.broadcast %71 : vector<8x1xf32> to vector<8x32xf32>
    %75 = arith.mulf %74, %73 : vector<8x32xf32>
    %76 = arith.addf %56, %75 : vector<8x32xf32>
    %c0_26 = arith.constant 0 : index
    %c0_27 = arith.constant 0 : index
    %77 = vector.load %arg9[%c0_26, %c0_27] : memref<8x32xf32, #tpu.memory_space<vmem>>, vector<8x32xf32>
    tpu.vector_store %arg9[%c0_26, %c0_27], %76 {strides = array<i32>} : memref<8x32xf32, #tpu.memory_space<vmem>>, vector<8x32xf32>,
    return
  }
  func.func @transform_0(%arg0: i32) -> (i32, i32, i32) {
    %c0_i32 = arith.constant 0 : i32
    %c0_i32_0 = arith.constant 0 : i32
    %c0_i32_1 = arith.constant 0 : i32
    return %c0_i32, %arg0, %c0_i32_0 : i32, i32, i32
  }
  func.func @transform_1(%arg0: i32) -> (i32, i32) {
    %c0_i32 = arith.constant 0 : i32
    %c0_i32_0 = arith.constant 0 : i32
    return %arg0, %c0_i32 : i32, i32
  }
  func.func @transform_2(%arg0: i32) -> (i32, i32) {
    %c0_i32 = arith.constant 0 : i32
    %c0_i32_0 = arith.constant 0 : i32
    return %arg0, %c0_i32 : i32, i32
  }
  func.func @transform_3(%arg0: i32) -> (i32, i32) {
    %c0_i32 = arith.constant 0 : i32
    %c0_i32_0 = arith.constant 0 : i32
    %c0_i32_1 = arith.constant 0 : i32
    return %c0_i32, %c0_i32_0 : i32, i32
  }
  func.func @transform_4(%arg0: i32) -> (i32, i32) {
    %c0_i32 = arith.constant 0 : i32
    %c0_i32_0 = arith.constant 0 : i32
    %c0_i32_1 = arith.constant 0 : i32
    return %c0_i32, %c0_i32_0 : i32, i32
  }
  func.func @transform_5(%arg0: i32) -> (i32, i32) {
    %c0_i32 = arith.constant 0 : i32
    %c0_i32_0 = arith.constant 0 : i32
    %c0_i32_1 = arith.constant 0 : i32
    return %c0_i32, %c0_i32_0 : i32, i32
  }
  func.func @transform_6(%arg0: i32) -> (i32, i32) {
    %c0_i32 = arith.constant 0 : i32
    %c0_i32_0 = arith.constant 0 : i32
    %c0_i32_1 = arith.constant 0 : i32
    return %c0_i32, %c0_i32_0 : i32, i32
  }
  func.func @transform_7(%arg0: i32) -> i32 {
    %c0_i32 = arith.constant 0 : i32
    %c0_i32_0 = arith.constant 0 : i32
    return %c0_i32 : i32
  }
  func.func @transform_8(%arg0: i32) -> (i32, i32) {
    %c0_i32 = arith.constant 0 : i32
    %c0_i32_0 = arith.constant 0 : i32
    return %arg0, %c0_i32 : i32, i32
  }
}

</mosaic_0001>

<llo_original>
// kernel: tpu_custom_call.1
$region0: #{tpu_custom_call.1}
  #allocation0 [shape = 'u32[]', space=smem, size = 0x4, offset = 0x4, fixed_abs, tag = 'smem constant byte address 0x4 - core index']
  #allocation1 [shape = 'u32[144,128]{1,0:T(1,128)}', space=vmem, size = 0x12000, scoped, tag = 'internal scratch']
  #allocation2 [shape = 'f32[1]{0:T(128)S(6)}', space=smem, size = 0x200, scoped, tag = 'scoped memory for tpu_custom_call.1']
  %s0 = inlined_call_operand.hbm [shape: f32[3,8,32], index: 0, kind: input, shape index: {}]
  %s1 = inlined_call_operand.vmem [shape: f32[8,32], index: 1, kind: input, shape index: {}]
  %s2 = inlined_call_operand.vmem [shape: f32[8,3], index: 2, kind: input, shape index: {}]
  %s3 = inlined_call_operand.vmem [shape: bf16[32,32], index: 3, kind: input, shape index: {}]
  %s4 = inlined_call_operand.hbm [shape: bf16[32,32], index: 4, kind: input, shape index: {}]
  %s5 = inlined_call_operand.vmem [shape: f32[1,32], index: 5, kind: input, shape index: {}]
  %s6 = inlined_call_operand.vmem [shape: f32[1,32], index: 6, kind: input, shape index: {}]
  %s7 = inlined_call_operand.<no memory space> [shape: f32[1], index: 7, kind: input, shape index: {}]
  %s8 = inlined_call_operand.hbm [shape: f32[8,32], index: 8, kind: output, shape index: {}]
  %s9 = sld [smem:[#allocation0]]
  $region50: #{tpu_custom_call.1} parent=0
    _
  %s11 = ssub.s32 1, %s9
  %s12 = scalar_select 0, %s11, %s9
  %13 = sst [smem:[#allocation2]] %s7
  $region1: #{tpu_custom_call.1} parent=0
    #allocation3 [shape = 'u8[12288]{0}', space=vmem, size = 0x3000, scoped, tag = 'input window, operand 0, single buffered']
    #allocation4 [shape = 's32[1]{0}', space=sflag, size = 0x4, scoped, tag = 'scoped memory for tpu_custom_call.1']
    #allocation5 [shape = 's32[1]{0}', space=sflag, size = 0x4, scoped, tag = 'scoped memory for tpu_custom_call.1']
    #allocation6 [shape = 'u8[8192]{0}', space=vmem, size = 0x2000, scoped, tag = 'input window, operand 4, single buffered']
    #allocation7 [shape = 's32[1]{0}', space=sflag, size = 0x4, scoped, tag = 'scoped memory for tpu_custom_call.1']
    #allocation8 [shape = 'u8[4096]{0}', space=vmem, size = 0x1000, scoped, tag = 'output window, operand 0, single buffered']
    %14 = vsyncpa [#allocation4], 0
    %15 = vsyncpa [#allocation7], 0
    %16 = vsyncpa [#allocation5], 0
    // Predicated region
    $region2: #{tpu_custom_call.1} parent=1 // pred_check
      _
    $region3: #{tpu_custom_call.1} parent=1 // pred_check_branch
      %18 = sbr.rel (0) target = $region5
    $region4: #{tpu_custom_call.1} parent=1 // pred_region
      %s20 = ssub.s32 384, 384
      %21 = vsyncadd [#allocation4], %s20
      %s22 = sshll.u32 [#allocation3], 4
      %s23 = int_to_ptr.vmem [resolvable:$true] %s22
      %28 = dma.hbm_to_vmem [thread:$0]  %s0, 384, %s23, [#allocation4], 128, 128, 8
    $region5: #{tpu_custom_call.1} parent=1 // pred_fallthru
      _
    // Predicated region
    $region6: #{tpu_custom_call.1} parent=1 // pred_check
      _
    $region7: #{tpu_custom_call.1} parent=1 // pred_check_branch
      %30 = sbr.rel (0) target = $region9
    $region8: #{tpu_custom_call.1} parent=1 // pred_region
      _
    $region9: #{tpu_custom_call.1} parent=1 // pred_fallthru
      _
    // Predicated region
    $region10: #{tpu_custom_call.1} parent=1 // pred_check
      _
    $region11: #{tpu_custom_call.1} parent=1 // pred_check_branch
      %32 = sbr.rel (0) target = $region13
    $region12: #{tpu_custom_call.1} parent=1 // pred_region
      _
    $region13: #{tpu_custom_call.1} parent=1 // pred_fallthru
      _
    // Predicated region
    $region14: #{tpu_custom_call.1} parent=1 // pred_check
      _
    $region15: #{tpu_custom_call.1} parent=1 // pred_check_branch
      %34 = sbr.rel (0) target = $region17
    $region16: #{tpu_custom_call.1} parent=1 // pred_region
      _
    $region17: #{tpu_custom_call.1} parent=1 // pred_fallthru
      _
    // Predicated region
    $region18: #{tpu_custom_call.1} parent=1 // pred_check
      _
    $region19: #{tpu_custom_call.1} parent=1 // pred_check_branch
      %36 = sbr.rel (0) target = $region21
    $region20: #{tpu_custom_call.1} parent=1 // pred_region
      %s38 = ssub.s32 256, 256
      %39 = vsyncadd [#allocation7], %s38
      %s40 = sshll.u32 [#allocation6], 4
      %s41 = int_to_ptr.vmem [resolvable:$true] %s40
      %46 = dma.hbm_to_vmem [thread:$0]  %s4, 256, %s41, [#allocation7], 64, 64, 4
    $region21: #{tpu_custom_call.1} parent=1 // pred_fallthru
      _
    // Predicated region
    $region22: #{tpu_custom_call.1} parent=1 // pred_check
      _
    $region23: #{tpu_custom_call.1} parent=1 // pred_check_branch
      %48 = sbr.rel (0) target = $region25
    $region24: #{tpu_custom_call.1} parent=1 // pred_region
      _
    $region25: #{tpu_custom_call.1} parent=1 // pred_fallthru
      _
    // Predicated region
    $region26: #{tpu_custom_call.1} parent=1 // pred_check
      _
    $region27: #{tpu_custom_call.1} parent=1 // pred_check_branch
      %50 = sbr.rel (0) target = $region29
    $region28: #{tpu_custom_call.1} parent=1 // pred_region
      _
    $region29: #{tpu_custom_call.1} parent=1 // pred_fallthru
      _
    // Predicated region
    $region30: #{tpu_custom_call.1} parent=1 // pred_check
      _
    $region31: #{tpu_custom_call.1} parent=1 // pred_check_branch
      %52 = sbr.rel (0) target = $region33
    $region32: #{tpu_custom_call.1} parent=1 // pred_region
      _
    $region33: #{tpu_custom_call.1} parent=1 // pred_fallthru
      _
    // Predicated region
    $region34: #{tpu_custom_call.1} parent=1 // pred_check
      _
    $region35: #{tpu_custom_call.1} parent=1 // pred_check_branch
      %54 = sbr.rel (0) target = $region37
    $region36: #{tpu_custom_call.1} parent=1 // pred_region
      %55 = dma.done [#allocation4], 384
    $region37: #{tpu_custom_call.1} parent=1 // pred_fallthru
      _
    // Predicated region
    $region38: #{tpu_custom_call.1} parent=1 // pred_check
      _
    $region39: #{tpu_custom_call.1} parent=1 // pred_check_branch
      %57 = sbr.rel (0) target = $region41
    $region40: #{tpu_custom_call.1} parent=1 // pred_region
      %58 = dma.done [#allocation7], 256
    $region41: #{tpu_custom_call.1} parent=1 // pred_fallthru
      _
    %v60 = vld [vmem:[%s1] sm:$0xff]
    %v61 = vpack.c.bf16 %v60, %v60
    %v62 = vld [vmem:[#allocation6] sm:$0xf]
    %v63 = vld [vmem:[#allocation6 + $0x4] sm:$0xf]
    %v64 = vld [vmem:[#allocation6 + $0x8] sm:$0xf]
    %v65 = vld [vmem:[#allocation6 + $0xc] sm:$0xf]
    %v66 = vld [vmem:[%s5] sm:$0x1]
    %v68 = vlaneseq
    %v69 = vshrl.u32 %v68, 7
    %v70 = vsub.s32 0, %v69
    %v71 = vrot.slane %v66, %v70
    %v77 = vunpack.c.l.b16 %v62
    %v78 = vunpack.c.l.b16 %v63
    %v79 = vunpack.c.l.b16 %v64
    %v80 = vunpack.c.l.b16 %v65
    %v81 = vpack.c.b16 %v78, %v77
    %v82 = vpack.c.b16 %v80, %v79
    %vm85 = vcmask 261120
    %v87 = vsel %vm85, %v61, 0
    %89 = vmatprep.subr.bf16.mxu0 0
    %90 = vmatpush1.bf16.msra.mxu0 %v81
    %91 = vmatprep.subr.bf16.mxu0 0
    %92 = vmatpush1.bf16.msra.mxu0 %v82
    %93 = vmatprep.subr.bf16.mxu0 0
    %94 = vmatpush1.bf16.msra.mxu0 0
    %95 = vmatprep.subr.bf16.mxu0 0
    %96 = vmatpush1.bf16.msra.mxu0 0
    %97 = vmatprep.subr.bf16.mxu0 0
    %98 = vmatpush1.bf16.msra.mxu0 0
    %99 = vmatprep.subr.bf16.mxu0 0
    %100 = vmatpush1.bf16.msra.mxu0 0
    %101 = vmatprep.subr.bf16.mxu0 0
    %102 = vmatpush1.bf16.msra.mxu0 0
    %103 = vmatprep.subr.bf16.mxu0 0
    %104 = vmatpush1.bf16.msra.mxu0 0
    %105 = vmatprep.subr.bf16.mxu0 0
    %106 = vmatpush1.bf16.msra.mxu0 0
    %107 = vmatprep.subr.bf16.mxu0 0
    %108 = vmatpush1.bf16.msra.mxu0 0
    %109 = vmatprep.subr.bf16.mxu0 0
    %110 = vmatpush1.bf16.msra.mxu0 0
    %111 = vmatprep.subr.bf16.mxu0 0
    %112 = vmatpush1.bf16.msra.mxu0 0
    %113 = vmatprep.subr.bf16.mxu0 0
    %114 = vmatpush1.bf16.msra.mxu0 0
    %115 = vmatprep.subr.bf16.mxu0 0
    %116 = vmatpush1.bf16.msra.mxu0 0
    %117 = vmatprep.subr.bf16.mxu0 0
    %118 = vmatpush1.bf16.msra.mxu0 0
    %119 = vmatprep.subr.bf16.mxu0 0
    %120 = vmatpush1.bf16.msra.mxu0 0
    %121 = vmatprep.mubr.bf16.mxu0 0
    %122 = vmatmul.mubr.bf16.gmra.mrb[0].mxu0 %v87
    %v123 = vpop.f32.mrb[0].mxu0
    %v124 = vadd.f32 %v71, %v123
    %v125 = vpop.f32.mrb[0].mxu0
    %v126 = vpop.f32.mrb[0].mxu0
    %v127 = vpop.f32.mrb[0].mxu0
    %128 = vdwg.mxu0
    %v129 = vld [vmem:[#allocation3] sm:$0xff]
    %v130 = vld [vmem:[#allocation3 + $0x8] sm:$0xff]
    %v131 = vld [vmem:[#allocation3 + $0x10] sm:$0xff]
    %v132 = vpack.c.bf16 %v130, %v129
    %v133 = vpack.c.bf16 %v131, %v131
    %v134 = vld [vmem:[%s3] sm:$0xf]
    %v135 = vld [vmem:[%s3 + $0x4] sm:$0xf]
    %v136 = vld [vmem:[%s3 + $0x8] sm:$0xf]
    %v137 = vld [vmem:[%s3 + $0xc] sm:$0xf]
    %v142 = vunpack.c.l.b16 %v134
    %v143 = vunpack.c.l.b16 %v135
    %v144 = vunpack.c.l.b16 %v136
    %v145 = vunpack.c.l.b16 %v137
    %v146 = vpack.c.b16 %v143, %v142
    %v147 = vpack.c.b16 %v145, %v144
    %v151 = vsel %vm85, %v132, 0
    %v154 = vsel %vm85, %v133, 0
    %156 = vmatprep.subr.bf16.mxu0 0
    %157 = vmatpush1.bf16.msra.mxu0 %v146
    %158 = vmatprep.subr.bf16.mxu0 0
    %159 = vmatpush1.bf16.msra.mxu0 %v147
    %160 = vmatprep.subr.bf16.mxu0 0
    %161 = vmatpush1.bf16.msra.mxu0 0
    %162 = vmatprep.subr.bf16.mxu0 0
    %163 = vmatpush1.bf16.msra.mxu0 0
    %164 = vmatprep.subr.bf16.mxu0 0
    %165 = vmatpush1.bf16.msra.mxu0 0
    %166 = vmatprep.subr.bf16.mxu0 0
    %167 = vmatpush1.bf16.msra.mxu0 0
    %168 = vmatprep.subr.bf16.mxu0 0
    %169 = vmatpush1.bf16.msra.mxu0 0
    %170 = vmatprep.subr.bf16.mxu0 0
    %171 = vmatpush1.bf16.msra.mxu0 0
    %172 = vmatprep.subr.bf16.mxu0 0
    %173 = vmatpush1.bf16.msra.mxu0 0
    %174 = vmatprep.subr.bf16.mxu0 0
    %175 = vmatpush1.bf16.msra.mxu0 0
    %176 = vmatprep.subr.bf16.mxu0 0
    %177 = vmatpush1.bf16.msra.mxu0 0
    %178 = vmatprep.subr.bf16.mxu0 0
    %179 = vmatpush1.bf16.msra.mxu0 0
    %180 = vmatprep.subr.bf16.mxu0 0
    %181 = vmatpush1.bf16.msra.mxu0 0
    %182 = vmatprep.subr.bf16.mxu0 0
    %183 = vmatpush1.bf16.msra.mxu0 0
    %184 = vmatprep.subr.bf16.mxu0 0
    %185 = vmatpush1.bf16.msra.mxu0 0
    %186 = vmatprep.subr.bf16.mxu0 0
    %187 = vmatpush1.bf16.msra.mxu0 0
    %188 = vmatprep.mubr.bf16.mxu0 0
    %189 = vmatmul.mubr.bf16.gmra.mrb[0].mxu0 %v151
    %v190 = vpop.f32.mrb[0].mxu0
    %v191 = vadd.f32 0.0, %v190
    %v192 = vpop.f32.mrb[0].mxu0
    %v193 = vpop.f32.mrb[0].mxu0
    %v194 = vadd.f32 0.0, %v193
    %v195 = vpop.f32.mrb[0].mxu0
    %196 = vmatprep.mubr.bf16.mxu0 0
    %197 = vmatmul.mubr.bf16.gmra.mrb[0].mxu0 %v154
    %v198 = vpop.f32.mrb[0].mxu0
    %v199 = vadd.f32 0.0, %v198
    %v200 = vpop.f32.mrb[0].mxu0
    %v201 = vpop.f32.mrb[0].mxu0
    %v202 = vpop.f32.mrb[0].mxu0
    %203 = vdwg.mxu0
    %v204 = vld [vmem:[%s6] sm:$0x1]
    %s205 = sld [smem:[#allocation2]]
    %v206 = vld [vmem:[%s2] sm:$0xff]
    %v207 = vadd.f32 %v191, %v124
    %v208 = vtanh.pop %v207
    %v210 = vlaneseq
    %v211 = vshrl.u32 %v210, 7
    %v212 = vsub.s32 0, %v211
    %v213 = vrot.slane %v204, %v212
    %v215 = vmul.f32 %v208, %v213
    %v216 = vsel %vm85, %v215, 0.0
    %217 = vadd.xlane.f32.xlu0 %v216
    %v218 = vpop.xlane.xlu0 %217
    %v219 = vstv %s205
    %v220 = vadd.f32 %v218, %v219
    %vm221 = vcmp.ne.f32.partialorder %v206, 0.0
    %v222 = vsel %vm221, -1e+09, %v220
    %224 = vset.pattern.permute.xlu0 0
    %225 = vperm.xlu0 %224, %v222
    %v226 = vpop.permute.xlu0 %225
    %v228 = vmul.f32 %v226, %v129
    %v229 = vadd.f32 %v228, 0.0
    %v230 = vadd.f32 %v194, %v124
    %v231 = vtanh.pop %v230
    %v232 = vmul.f32 %v231, %v213
    %v233 = vsel %vm85, %v232, 0.0
    %234 = vadd.xlane.f32.xlu0 %v233
    %v235 = vpop.xlane.xlu0 %234
    %v236 = vadd.f32 %v235, %v219
    %v237 = vsel %vm221, -1e+09, %v236
    %239 = vset.pattern.permute.xlu0 1
    %240 = vperm.xlu0 %239, %v237
    %v241 = vpop.permute.xlu0 %240
    %v243 = vmul.f32 %v241, %v130
    %v244 = vadd.f32 %v229, %v243
    %v245 = vadd.f32 %v199, %v124
    %v246 = vtanh.pop %v245
    %v247 = vmul.f32 %v246, %v213
    %v248 = vsel %vm85, %v247, 0.0
    %249 = vadd.xlane.f32.xlu0 %v248
    %v250 = vpop.xlane.xlu0 %249
    %v251 = vadd.f32 %v250, %v219
    %v252 = vsel %vm221, -1e+09, %v251
    %254 = vset.pattern.permute.xlu0 2
    %255 = vperm.xlu0 %254, %v252
    %v256 = vpop.permute.xlu0 %255
    %v258 = vmul.f32 %v256, %v131
    %v259 = vadd.f32 %v244, %v258
    %260 = vst.msk [vmem:[#allocation8] sm:$0xff] %vm85, %v259
    // Predicated region
    $region42: #{tpu_custom_call.1} parent=1 // pred_check
      _
    $region43: #{tpu_custom_call.1} parent=1 // pred_check_branch
      %262 = sbr.rel (0) target = $region45
    $region44: #{tpu_custom_call.1} parent=1 // pred_region
      %s264 = ssub.s32 128, 128
      %265 = vsyncadd [#allocation5], %s264
      %s267 = sshll.u32 [#allocation8], 4
      %s268 = int_to_ptr.vmem [resolvable:$true] %s267
      %270 = dma.vmem_to_hbm [thread:$0]  %s268, 128, %s8, [#allocation5]
    $region45: #{tpu_custom_call.1} parent=1 // pred_fallthru
      _
    // Predicated region
    $region46: #{tpu_custom_call.1} parent=1 // pred_check
      _
    $region47: #{tpu_custom_call.1} parent=1 // pred_check_branch
      %272 = sbr.rel (0) target = $region49
    $region48: #{tpu_custom_call.1} parent=1 // pred_region
      %273 = dma.done [#allocation5], 128
    $region49: #{tpu_custom_call.1} parent=1 // pred_fallthru
      _
    %274 = vsyncpa [#allocation4], 1
    %275 = vsyncpa [#allocation7], 1
    %276 = vsyncpa [#allocation5], 1

</llo_original>
